<compile_context>
chip_gen: v7x
topology: tpu7x:2x2x1
jax: 0.10.0
libtpu: 0.0.40
codegen_flags: <defaults>
</compile_context>

<pallas_src>
import functools

import jax
import jax.numpy as jnp
from jax import lax
from jax.experimental import pallas as pl
from jax.experimental.pallas import tpu as pltpu

_VMEM_LIMIT_FALLBACK = 40 * 1024 * 1024  # fits v7x's 64 MiB physical with headroom


def _scoped_vmem_limit():
    """Per-generation scoped-VMEM limit (v7x has only 64 MiB physical per TC)."""
    limit = _VMEM_LIMIT_FALLBACK
    try:
        cap = getattr(pltpu.get_tpu_info(), "vmem_capacity_bytes", None)
        if cap:
            limit = min(limit, (int(cap) * 3) // 4)
    except Exception:
        pass
    return limit


def _azloss_policy_kernel(pi_ref, p_ref, o_ref, *, true_b, tb, mask_rows):
    """Writes the per-batch-tile partial of sum(pi * p) into its own out block."""
    prod = pi_ref[...].astype(jnp.float32) * p_ref[...].astype(jnp.float32)
    if mask_rows:
        # Ragged last tile: rows past the true batch size hold unspecified data
        # (no padding copy is made), so they MUST be masked before reducing.
        rows_left = true_b - pl.program_id(0) * tb
        row_idx = lax.broadcasted_iota(jnp.int32, prod.shape, 0)
        prod = jnp.where(row_idx < rows_left, prod, 0.0)
    partial = jnp.sum(prod)  # one fused reduce per (large) tile
    # Broadcast the scalar into the (1, 8, 128) output block (unmasked vst).
    o_ref[...] = jnp.zeros(o_ref.shape, jnp.float32) + partial


def _choose_batch_tile(batch, actions, itemsize, vmem_limit):
    """Largest 8-row-aligned batch tile keeping the 4 double-buffered pi/p tiles
    within ~60% of the scoped VMEM limit."""
    budget = (vmem_limit * 3) // 5
    rows = budget // max(1, 4 * actions * itemsize)  # 2 inputs x 2 pipeline buffers
    if rows >= batch:
        return batch  # single tile; block == full array dims
    # TODO(synk): for extreme action spaces (A >~ 300K) tile the A axis too
    # instead of relying on the minimum 8-row tile fitting under vmem_limit.
    return max(8, (rows // 8) * 8)


def az_loss(pi, p, z, v, *, tb=None):
    """Pallas implementation of AZLoss.forward(pi, p, z, v) -> scalar f32.

    pi/p may be bf16 (recommended: halves HBM bytes on this HBM-bound kernel);
    accumulation is always f32. z/v are tiny and handled in plain XLA.
    """
    B, A = pi.shape
    vmem_limit = _scoped_vmem_limit()

    if tb is None:
        tb = _choose_batch_tile(B, A, jnp.dtype(pi.dtype).itemsize, vmem_limit)
    tb = min(int(tb), B)
    if tb < B and tb % 8 != 0:
        raise ValueError("batch tile must be a multiple of 8 when smaller than B")

    num_tiles = pl.cdiv(B, tb)
    mask_rows = (B % tb) != 0

    kernel = functools.partial(
        _azloss_policy_kernel, true_b=B, tb=tb, mask_rows=mask_rows
    )

    partials = pl.pallas_call(
        kernel,
        out_shape=jax.ShapeDtypeStruct((num_tiles, 8, 128), jnp.float32),
        grid=(num_tiles,),
        in_specs=[
            pl.BlockSpec((tb, A), lambda i: (i, 0)),  # pi tile
            pl.BlockSpec((tb, A), lambda i: (i, 0)),  # p  tile
        ],
        out_specs=pl.BlockSpec((1, 8, 128), lambda i: (i, 0, 0)),
        compiler_params=pltpu.CompilerParams(
            # Independent per-tile partials -> batch grid shards across both
            # TensorCores on v7x (no-op on single-TC v5e/v6e).
            dimension_semantics=("parallel",),
            vmem_limit_bytes=vmem_limit,
        ),
    )(pi, p)

    # Finish the reduction in the wrapper (tiny): loss = (sum v_err - sum p_err)/B
    p_term = jnp.sum(partials[:, 0, 0])
    zf = jnp.reshape(z, (-1,)).astype(jnp.float32)
    vf = jnp.reshape(v, (-1,)).astype(jnp.float32)
    v_term = jnp.sum((zf - vf) ** 2)
    return (v_term - p_term) / jnp.float32(B)


def az_loss_ref(pi, p, z, v):
    """Pure-JAX reference (f32 accumulation) for validation."""
    pi = pi.astype(jnp.float32)
    p = p.astype(jnp.float32)
    z = z.reshape(-1).astype(jnp.float32)
    v = v.reshape(-1).astype(jnp.float32)
    v_err = (z - v) ** 2
    p_err = jnp.sum(pi * p, axis=-1)
    return jnp.mean(v_err - p_err)


def _make_inputs(key, B, A, dtype=jnp.float32):
    k1, k2, k3, k4 = jax.random.split(key, 4)
    # pi: target policy (probabilities); p: predicted log-probabilities.
    pi = jax.nn.softmax(jax.random.normal(k1, (B, A), dtype=jnp.float32), axis=-1)
    p = jax.nn.log_softmax(jax.random.normal(k2, (B, A), dtype=jnp.float32), axis=-1)
    z = jax.random.uniform(k3, (B, 1), minval=-1.0, maxval=1.0, dtype=jnp.float32)
    v = jax.random.uniform(k4, (B, 1), minval=-1.0, maxval=1.0, dtype=jnp.float32)
    return pi.astype(dtype), p.astype(dtype), z, v


if __name__ == "__main__":
    root = jax.random.PRNGKey(0)
    k_a, k_b, k_c = jax.random.split(root, 3)

    # 1) Tiny single-tile case (B=8 games, A=128 actions).
    pi, p, z, v = _make_inputs(k_a, 8, 128)
    out = jax.block_until_ready(az_loss(pi, p, z, v))
    ref = jax.block_until_ready(az_loss_ref(pi, p, z, v))
    assert jnp.allclose(out, ref, rtol=1e-5, atol=1e-5), (out, ref)

    # 2) Gridded ragged case: B=200, tile=128 -> grid=(2,), last tile has only
    #    72 valid rows. Exercises the in-kernel mask (no jnp.pad copy) and the
    #    per-tile "parallel" partial outputs.
    pi, p, z, v = _make_inputs(k_b, 200, 256)
    out = jax.block_until_ready(az_loss(pi, p, z, v, tb=128))
    ref = jax.block_until_ready(az_loss_ref(pi, p, z, v))
    assert jnp.allclose(out, ref, rtol=1e-5, atol=1e-5), (out, ref)

    # 3) bf16 policy storage (halves HBM bytes; kernel upcasts to f32).
    pi, p, z, v = _make_inputs(k_c, 8, 128, dtype=jnp.bfloat16)
    out = jax.block_until_ready(az_loss(pi, p, z, v))
    ref = jax.block_until_ready(az_loss_ref(pi, p, z, v))
    assert jnp.allclose(out, ref, rtol=1e-4, atol=1e-4), (out, ref)

    print("KERNEL_OK")
</pallas_src>

<mosaic_0001>
module attributes {stable_mosaic.version = 11 : i64} {
  func.func @_azloss_policy_kernel(%arg0: i32, %arg1: memref<8x128xf32, #tpu.memory_space<vmem>>, %arg2: memref<8x128xf32, #tpu.memory_space<vmem>>, %arg3: memref<1x8x128xf32, #tpu.memory_space<vmem>>) attributes {dimension_semantics = [#tpu.dimension_semantics<parallel>], iteration_bounds = array<i64: 1>, scalar_prefetch = 0 : i64, scratch_operands = 0 : i64, tpu.core_type = #tpu.core_type<tc>, window_params = [{transform_indices = @transform_0, window_bounds = array<i64: 8, 128>}, {transform_indices = @transform_1, window_bounds = array<i64: 8, 128>}, {transform_indices = @transform_2, window_bounds = array<i64: 1, 8, 128>}]} {
    %c0 = arith.constant 0 : index
    %c0_0 = arith.constant 0 : index
    %0 = vector.load %arg1[%c0, %c0_0] : memref<8x128xf32, #tpu.memory_space<vmem>>, vector<8x128xf32>
    %c0_1 = arith.constant 0 : index
    %c0_2 = arith.constant 0 : index
    %1 = vector.load %arg2[%c0_1, %c0_2] : memref<8x128xf32, #tpu.memory_space<vmem>>, vector<8x128xf32>
    %2 = arith.mulf %0, %1 : vector<8x128xf32>
    %3 = vector.shape_cast %2 : vector<8x128xf32> to vector<1x8x128xf32>
    %cst = arith.constant dense<0.000000e+00> : vector<1xf32>
    %4 = vector.multi_reduction <add>, %3, %cst [1, 2] : vector<1x8x128xf32> to vector<1xf32>
    %5 = vector.shape_cast %4 : vector<1xf32> to vector<1x1x1xf32>
    %6 = vector.extract %5[0, 0, 0] : f32 from vector<1x1x1xf32>
    %cst_3 = arith.constant 0.000000e+00 : f32
    %7 = vector.broadcast %cst_3 : f32 to vector<1x8x128xf32>
    %8 = vector.broadcast %6 : f32 to vector<1x8x128xf32>
    %9 = arith.addf %7, %8 : vector<1x8x128xf32>
    %c0_4 = arith.constant 0 : index
    %c0_5 = arith.constant 0 : index
    %c0_6 = arith.constant 0 : index
    %10 = vector.load %arg3[%c0_4, %c0_5, %c0_6] : memref<1x8x128xf32, #tpu.memory_space<vmem>>, vector<1x8x128xf32>
    tpu.vector_store %arg3[%c0_4, %c0_5, %c0_6], %9 {strides = array<i32>} : memref<1x8x128xf32, #tpu.memory_space<vmem>>, vector<1x8x128xf32>,
    return
  }
  func.func @transform_0(%arg0: i32) -> (i32, i32) {
    %c0_i32 = arith.constant 0 : i32
    %c0_i32_0 = arith.constant 0 : i32
    return %arg0, %c0_i32 : i32, i32
  }
  func.func @transform_1(%arg0: i32) -> (i32, i32) {
    %c0_i32 = arith.constant 0 : i32
    %c0_i32_0 = arith.constant 0 : i32
    return %arg0, %c0_i32 : i32, i32
  }
  func.func @transform_2(%arg0: i32) -> (i32, i32, i32) {
    %c0_i32 = arith.constant 0 : i32
    %c0_i32_0 = arith.constant 0 : i32
    %c0_i32_1 = arith.constant 0 : i32
    return %arg0, %c0_i32, %c0_i32_0 : i32, i32, i32
  }
}

</mosaic_0001>

<llo_original>
// kernel: tpu_custom_call.1
$region0: #{tpu_custom_call.1}
  #allocation0 [shape = 'u32[]', space=smem, size = 0x4, offset = 0x4, fixed_abs, tag = 'smem constant byte address 0x4 - core index']
  #allocation1 [shape = 'u32[144,128]{1,0:T(1,128)}', space=vmem, size = 0x12000, scoped, tag = 'internal scratch']
  %s0 = inlined_call_operand.hbm [shape: f32[8,128], index: 0, kind: input, shape index: {}]
  %s1 = inlined_call_operand.hbm [shape: f32[8,128], index: 1, kind: input, shape index: {}]
  %s2 = inlined_call_operand.hbm [shape: f32[1,8,128], index: 2, kind: output, shape index: {}]
  %s3 = sld [smem:[#allocation0]]
  $region26: #{tpu_custom_call.1} parent=0
    _
  %s5 = ssub.s32 1, %s3
  %s6 = scalar_select 0, %s5, %s3
  $region1: #{tpu_custom_call.1} parent=0
    #allocation2 [shape = 'u8[4096]{0}', space=vmem, size = 0x1000, scoped, tag = 'input window, operand 0, single buffered']
    #allocation3 [shape = 's32[1]{0}', space=sflag, size = 0x4, scoped, tag = 'scoped memory for tpu_custom_call.1']
    #allocation4 [shape = 's32[1]{0}', space=sflag, size = 0x4, scoped, tag = 'scoped memory for tpu_custom_call.1']
    #allocation5 [shape = 'u8[4096]{0}', space=vmem, size = 0x1000, scoped, tag = 'input window, operand 1, single buffered']
    #allocation6 [shape = 's32[1]{0}', space=sflag, size = 0x4, scoped, tag = 'scoped memory for tpu_custom_call.1']
    #allocation7 [shape = 'u8[4096]{0}', space=vmem, size = 0x1000, scoped, tag = 'output window, operand 0, single buffered']
    %7 = vsyncpa [#allocation3], 0
    %8 = vsyncpa [#allocation6], 0
    %9 = vsyncpa [#allocation4], 0
    // Predicated region
    $region2: #{tpu_custom_call.1} parent=1 // pred_check
      _
    $region3: #{tpu_custom_call.1} parent=1 // pred_check_branch
      %11 = sbr.rel (0) target = $region5
    $region4: #{tpu_custom_call.1} parent=1 // pred_region
      %s13 = ssub.s32 128, 128
      %14 = vsyncadd [#allocation3], %s13
      %s16 = sshll.u32 [#allocation2], 4
      %s17 = int_to_ptr.vmem [resolvable:$true] %s16
      %19 = dma.hbm_to_vmem [thread:$0]  %s0, 128, %s17, [#allocation3]
    $region5: #{tpu_custom_call.1} parent=1 // pred_fallthru
      _
    // Predicated region
    $region6: #{tpu_custom_call.1} parent=1 // pred_check
      _
    $region7: #{tpu_custom_call.1} parent=1 // pred_check_branch
      %21 = sbr.rel (0) target = $region9
    $region8: #{tpu_custom_call.1} parent=1 // pred_region
      %s23 = ssub.s32 128, 128
      %24 = vsyncadd [#allocation6], %s23
      %s26 = sshll.u32 [#allocation5], 4
      %s27 = int_to_ptr.vmem [resolvable:$true] %s26
      %29 = dma.hbm_to_vmem [thread:$0]  %s1, 128, %s27, [#allocation6]
    $region9: #{tpu_custom_call.1} parent=1 // pred_fallthru
      _
    // Predicated region
    $region10: #{tpu_custom_call.1} parent=1 // pred_check
      _
    $region11: #{tpu_custom_call.1} parent=1 // pred_check_branch
      %31 = sbr.rel (0) target = $region13
    $region12: #{tpu_custom_call.1} parent=1 // pred_region
      %32 = dma.done [#allocation3], 128
    $region13: #{tpu_custom_call.1} parent=1 // pred_fallthru
      _
    // Predicated region
    $region14: #{tpu_custom_call.1} parent=1 // pred_check
      _
    $region15: #{tpu_custom_call.1} parent=1 // pred_check_branch
      %34 = sbr.rel (0) target = $region17
    $region16: #{tpu_custom_call.1} parent=1 // pred_region
      %35 = dma.done [#allocation6], 128
    $region17: #{tpu_custom_call.1} parent=1 // pred_fallthru
      _
    %v36 = vld [vmem:[#allocation2] sm:$0xff]
    %v37 = vld [vmem:[#allocation5] sm:$0xff]
    %v38 = vmul.f32 %v36, %v37
    %39 = vadd.xlane.f32.xlu0 %v38
    %v40 = vpop.xlane.xlu0 %39
    %v41 = vrot.slane %v40, 4
    %v42 = vadd.f32 %v40, %v41
    %v43 = vrot.slane %v42, 2
    %v44 = vadd.f32 %v42, %v43
    %v45 = vrot.slane %v44, 1
    %v46 = vadd.f32 %v44, %v45
    %s47 = vtos %v46
    %v48 = vstv %s47
    %v49 = vadd.f32 %v48, 0.0
    %50 = vst [vmem:[#allocation7] sm:$0xff] %v49
    // Predicated region
    $region18: #{tpu_custom_call.1} parent=1 // pred_check
      _
    $region19: #{tpu_custom_call.1} parent=1 // pred_check_branch
      %52 = sbr.rel (0) target = $region21
    $region20: #{tpu_custom_call.1} parent=1 // pred_region
      %s54 = ssub.s32 128, 128
      %55 = vsyncadd [#allocation4], %s54
      %s57 = sshll.u32 [#allocation7], 4
      %s58 = int_to_ptr.vmem [resolvable:$true] %s57
      %60 = dma.vmem_to_hbm [thread:$0]  %s58, 128, %s2, [#allocation4]
    $region21: #{tpu_custom_call.1} parent=1 // pred_fallthru
      _
    // Predicated region
    $region22: #{tpu_custom_call.1} parent=1 // pred_check
      _
    $region23: #{tpu_custom_call.1} parent=1 // pred_check_branch
      %62 = sbr.rel (0) target = $region25
    $region24: #{tpu_custom_call.1} parent=1 // pred_region
      %63 = dma.done [#allocation4], 128
    $region25: #{tpu_custom_call.1} parent=1 // pred_fallthru
      _
    %64 = vsyncpa [#allocation3], 1
    %65 = vsyncpa [#allocation6], 1
    %66 = vsyncpa [#allocation4], 1

</llo_original>
